<compile_context>
chip_gen: v6e
topology: v6e:2x2x1
jax: 0.10.0
libtpu: 0.0.40
codegen_flags: <defaults>
</compile_context>

<pallas_src>
import functools

import jax
import jax.numpy as jnp
from jax import lax
from jax.experimental import pallas as pl
from jax.experimental.pallas import tpu as pltpu

DROPOUT_P = 0.5
NORM_SCALE = 1.0
LANE = 128


# ---------------- kernel 1: dropout + linear  h = (x * mask) @ W^T ----------------
def hidden_kernel(x_ref, mask_ref, w_ref, h_ref):
    # TODO(synk): on real TPU the mask could be produced in-kernel with
    # pltpu.prng_random_bits; that primitive has no CPU/interpret lowering, so the
    # Bernoulli mask is generated in the wrapper and only applied here.
    xd = x_ref[...] * mask_ref[...]                       # f32 elementwise (v5e-safe)
    h = jnp.dot(xd.astype(jnp.bfloat16), w_ref[...],      # bf16 MXU, f32 accumulate
                preferred_element_type=jnp.float32)
    h_ref[...] = h.astype(jnp.bfloat16)


# ---------------- kernel 2: aggregation  agg = adj^T @ h (tiled matmul) ------------
def aggregate_kernel(adjt_ref, h_ref, out_ref, acc_ref):
    @pl.when(pl.program_id(1) == 0)
    def _():
        acc_ref[...] = jnp.zeros_like(acc_ref)

    acc_ref[...] += jnp.dot(adjt_ref[...], h_ref[...],
                            preferred_element_type=jnp.float32)

    @pl.when(pl.program_id(1) == pl.num_programs(1) - 1)
    def _():
        out_ref[...] = acc_ref[...]


# ---------------- kernel 3: PairNorm('PN-SI') + ReLU -------------------------------
def pairnorm_relu_kernel(agg_ref, out_ref, *, norm_scale):
    a = agg_ref[...]
    c = a - jnp.mean(a, axis=0, keepdims=True)                     # column centering
    inv = lax.rsqrt(1e-6 + jnp.sum(c * c, axis=1, keepdims=True))  # per-row 1/||c||
    out_ref[...] = jnp.maximum(c * (norm_scale * inv), 0.0)        # scale + ReLU


def _pick_tile(n, pref=512):
    """Largest tile <= pref that divides n (full dim for small n)."""
    if n <= pref:
        return n
    t = pref
    while n % t:
        t //= 2
    return max(t, 8)


def gcn_norm_forward(x, adj, w_t, dropout_key,
                     dropout_p=DROPOUT_P, norm_scale=NORM_SCALE):
    """x: (N, H) node features; adj: (N, N) dense adjacency; w_t: (H, H) = W^T."""
    N, H = x.shape
    Hp = ((H + LANE - 1) // LANE) * LANE          # lane-dense feature width

    vmem = pl.BlockSpec(memory_space=pltpu.MemorySpace.VMEM)

    # ---- wrapper-side layout prep (cheap XLA ops) ----
    x_p = jnp.pad(x.astype(jnp.float32), ((0, 0), (0, Hp - H)))
    w_p = jnp.pad(w_t.astype(jnp.float32),
                  ((0, Hp - H), (0, Hp - H))).astype(jnp.bfloat16)
    keep = jax.random.uniform(dropout_key, (N, Hp), dtype=jnp.float32) >= dropout_p
    mask = keep.astype(jnp.float32) * (1.0 / (1.0 - dropout_p))
    # GCNConv aggregation from dense_to_sparse(adj): out[j] = sum_i adj[i, j] * h[i]
    # == (adj^T @ h)[j].  Pass adj pre-transposed so the kernel contracts its LAST
    # axis (no XLU transpose of the (N, N) tile).  bf16 is exact for 0/1 edges.
    adj_t = jnp.transpose(adj).astype(jnp.bfloat16)
    # NOTE: GCNConv's bias is dropped: PairNorm 'PN-SI' subtracts the per-column
    # mean immediately afterwards, so a row-broadcast bias cancels exactly.

    # ---- 1) h = dropout(x) @ W^T (computed once, kept small & resident) ----
    h = pl.pallas_call(
        hidden_kernel,
        out_shape=jax.ShapeDtypeStruct((N, Hp), jnp.bfloat16),
        in_specs=[vmem, vmem, vmem],
        out_specs=vmem,
    )(x_p, mask, w_p)

    # ---- 2) agg = adj^T @ h (tiled, pipelined, megacore-parallel over output rows) ----
    tm = _pick_tile(N)          # output-row tile
    tk = _pick_tile(N)          # contraction tile over source nodes
    agg = pl.pallas_call(
        aggregate_kernel,
        out_shape=jax.ShapeDtypeStruct((N, Hp), jnp.float32),
        grid=(N // tm, N // tk),
        in_specs=[
            pl.BlockSpec((tm, tk), lambda i, k: (i, k)),
            pl.BlockSpec((tk, Hp), lambda i, k: (k, 0)),
        ],
        out_specs=pl.BlockSpec((tm, Hp), lambda i, k: (i, 0)),
        scratch_shapes=[pltpu.VMEM((tm, Hp), jnp.float32)],
        compiler_params=pltpu.CompilerParams(
            dimension_semantics=("parallel", "arbitrary")),
    )(adj_t, h)

    # ---- 3) PairNorm('PN-SI') + ReLU (global column mean -> single-block epilogue) ----
    out_p = pl.pallas_call(
        functools.partial(pairnorm_relu_kernel, norm_scale=norm_scale),
        out_shape=jax.ShapeDtypeStruct((N, Hp), jnp.float32),
        in_specs=[vmem],
        out_specs=vmem,
    )(agg)

    return out_p[:, :H], adj


if __name__ == "__main__":
    N, NHID = 64, 32  # 64 nodes, hidden size 32

    key = jax.random.PRNGKey(0)
    k_x, k_adj, k_w, k_drop = jax.random.split(key, 4)

    # node features
    x = jax.random.normal(k_x, (N, NHID), dtype=jnp.float32)

    # dense adjacency: random 0/1 edges, symmetric, zero diagonal
    a = (jax.random.uniform(k_adj, (N, N)) < 0.15).astype(jnp.float32)
    adj = jnp.maximum(a, a.T) * (1.0 - jnp.eye(N, dtype=jnp.float32))

    # GCNConv weight (glorot-style uniform), stored already transposed to (in, out)
    bound = 1.0 / jnp.sqrt(jnp.float32(NHID))
    w_t = jax.random.uniform(k_w, (NHID, NHID), dtype=jnp.float32,
                             minval=-bound, maxval=bound)

    out, adj_out = gcn_norm_forward(x, adj, w_t, k_drop)
    jax.block_until_ready(out)
    jax.block_until_ready(adj_out)

    assert out.shape == (N, NHID) and adj_out.shape == (N, N)
    assert bool(jnp.all(out >= 0.0))            # post-ReLU
    assert bool(jnp.all(jnp.isfinite(out)))
    print("KERNEL_OK")
</pallas_src>

<mosaic_0001>
module attributes {stable_mosaic.version = 11 : i64} {
  func.func @hidden_kernel(%arg0: memref<64x128xf32, #tpu.memory_space<vmem>>, %arg1: memref<64x128xf32, #tpu.memory_space<vmem>>, %arg2: memref<128x128xbf16, #tpu.memory_space<vmem>>, %arg3: memref<64x128xbf16, #tpu.memory_space<vmem>>) attributes {dimension_semantics = [], scalar_prefetch = 0 : i64, scratch_operands = 0 : i64, tpu.core_type = #tpu.core_type<tc>} {
    %c0 = arith.constant 0 : index
    %c0_0 = arith.constant 0 : index
    %0 = vector.load %arg0[%c0, %c0_0] : memref<64x128xf32, #tpu.memory_space<vmem>>, vector<64x128xf32>
    %c0_1 = arith.constant 0 : index
    %c0_2 = arith.constant 0 : index
    %1 = vector.load %arg1[%c0_1, %c0_2] : memref<64x128xf32, #tpu.memory_space<vmem>>, vector<64x128xf32>
    %2 = arith.mulf %0, %1 : vector<64x128xf32>
    %3 = arith.truncf %2 : vector<64x128xf32> to vector<64x128xbf16>
    %c0_3 = arith.constant 0 : index
    %c0_4 = arith.constant 0 : index
    %4 = vector.load %arg2[%c0_3, %c0_4] : memref<128x128xbf16, #tpu.memory_space<vmem>>, vector<128x128xbf16>
    %cst = arith.constant dense<0.000000e+00> : vector<64x128xf32>
    %5 = tpu.matmul %3, %4, %cst {dimension_numbers = #tpu.dot_dimension_numbers<[1], [0], [0], [1], [0, 0, 1, 1], [], []>} : vector<64x128xbf16>, vector<128x128xbf16>, vector<64x128xf32> -> vector<64x128xf32>
    %6 = arith.truncf %5 : vector<64x128xf32> to vector<64x128xbf16>
    %c0_5 = arith.constant 0 : index
    %c0_6 = arith.constant 0 : index
    %7 = vector.load %arg3[%c0_5, %c0_6] : memref<64x128xbf16, #tpu.memory_space<vmem>>, vector<64x128xbf16>
    tpu.vector_store %arg3[%c0_5, %c0_6], %6 {strides = array<i32>} : memref<64x128xbf16, #tpu.memory_space<vmem>>, vector<64x128xbf16>,
    return
  }
}

</mosaic_0001>

<llo_original>
// kernel: tpu_custom_call.1
$region0: #{tpu_custom_call.1}
  #allocation0 [shape = 'u32[]', space=smem, size = 0x4, offset = 0x4, fixed_abs, tag = 'smem constant byte address 0x4 - core index']
  #allocation1 [shape = 'u32[144,128]{1,0:T(1,128)}', space=vmem, size = 0x12000, scoped, tag = 'internal scratch']
  %s0 = inlined_call_operand.hbm [shape: f32[64,128], index: 0, kind: input, shape index: {}]
  %s1 = inlined_call_operand.hbm [shape: f32[64,128], index: 1, kind: input, shape index: {}]
  %s2 = inlined_call_operand.hbm [shape: bf16[128,128], index: 2, kind: input, shape index: {}]
  %s3 = inlined_call_operand.hbm [shape: bf16[64,128], index: 3, kind: output, shape index: {}]
  %s4 = sld [smem:[#allocation0]]
  $region34: #{tpu_custom_call.1} parent=0
    _
  %s6 = ssub.s32 1, %s4
  %s7 = scalar_select 0, %s6, %s4
  $region1: #{tpu_custom_call.1} parent=0
    #allocation2 [shape = 'u8[32768]{0}', space=vmem, size = 0x8000, scoped, tag = 'input window, operand 0, single buffered']
    #allocation3 [shape = 's32[1]{0}', space=sflag, size = 0x4, scoped, tag = 'scoped memory for tpu_custom_call.1']
    #allocation4 [shape = 's32[1]{0}', space=sflag, size = 0x4, scoped, tag = 'scoped memory for tpu_custom_call.1']
    #allocation5 [shape = 'u8[32768]{0}', space=vmem, size = 0x8000, scoped, tag = 'input window, operand 1, single buffered']
    #allocation6 [shape = 's32[1]{0}', space=sflag, size = 0x4, scoped, tag = 'scoped memory for tpu_custom_call.1']
    #allocation7 [shape = 'u8[32768]{0}', space=vmem, size = 0x8000, scoped, tag = 'input window, operand 2, single buffered']
    #allocation8 [shape = 'u8[16384]{0}', space=vmem, size = 0x4000, scoped, tag = 'output window, operand 0, single buffered']
    %8 = vsyncpa [#allocation3], 0
    %9 = vsyncpa [#allocation6], 0
    %10 = vsyncpa [#allocation4], 0
    // Predicated region
    $region2: #{tpu_custom_call.1} parent=1 // pred_check
      _
    $region3: #{tpu_custom_call.1} parent=1 // pred_check_branch
      %12 = sbr.rel (0) target = $region5
    $region4: #{tpu_custom_call.1} parent=1 // pred_region
      %s14 = ssub.s32 1024, 1024
      %15 = vsyncadd [#allocation3], %s14
      %s16 = sshll.u32 [#allocation2], 4
      %s17 = int_to_ptr.vmem [resolvable:$true] %s16
      %22 = dma.hbm_to_vmem [thread:$0]  %s0, 1024, %s17, [#allocation3], 128, 128, 8
    $region5: #{tpu_custom_call.1} parent=1 // pred_fallthru
      _
    // Predicated region
    $region6: #{tpu_custom_call.1} parent=1 // pred_check
      _
    $region7: #{tpu_custom_call.1} parent=1 // pred_check_branch
      %24 = sbr.rel (0) target = $region9
    $region8: #{tpu_custom_call.1} parent=1 // pred_region
      %s26 = ssub.s32 1024, 1024
      %27 = vsyncadd [#allocation6], %s26
      %s28 = sshll.u32 [#allocation5], 4
      %s29 = int_to_ptr.vmem [resolvable:$true] %s28
      %34 = dma.hbm_to_vmem [thread:$0]  %s1, 1024, %s29, [#allocation6], 128, 128, 8
    $region9: #{tpu_custom_call.1} parent=1 // pred_fallthru
      _
    // Predicated region
    $region10: #{tpu_custom_call.1} parent=1 // pred_check
      _
    $region11: #{tpu_custom_call.1} parent=1 // pred_check_branch
      %36 = sbr.rel (0) target = $region13
    $region12: #{tpu_custom_call.1} parent=1 // pred_region
      %s38 = ssub.s32 1024, 1024
      %39 = vsyncadd [#allocation6], %s38
      %s40 = sshll.u32 [#allocation7], 4
      %s41 = int_to_ptr.vmem [resolvable:$true] %s40
      %46 = dma.hbm_to_vmem [thread:$0]  %s2, 1024, %s41, [#allocation6], 64, 64, 4
    $region13: #{tpu_custom_call.1} parent=1 // pred_fallthru
      _
    // Predicated region
    $region14: #{tpu_custom_call.1} parent=1 // pred_check
      _
    $region15: #{tpu_custom_call.1} parent=1 // pred_check_branch
      %48 = sbr.rel (0) target = $region17
    $region16: #{tpu_custom_call.1} parent=1 // pred_region
      %49 = dma.done [#allocation3], 1024
    $region17: #{tpu_custom_call.1} parent=1 // pred_fallthru
      _
    // Predicated region
    $region18: #{tpu_custom_call.1} parent=1 // pred_check
      _
    $region19: #{tpu_custom_call.1} parent=1 // pred_check_branch
      %51 = sbr.rel (0) target = $region21
    $region20: #{tpu_custom_call.1} parent=1 // pred_region
      %52 = dma.done [#allocation6], 1024
    $region21: #{tpu_custom_call.1} parent=1 // pred_fallthru
      _
    // Predicated region
    $region22: #{tpu_custom_call.1} parent=1 // pred_check
      _
    $region23: #{tpu_custom_call.1} parent=1 // pred_check_branch
      %54 = sbr.rel (0) target = $region25
    $region24: #{tpu_custom_call.1} parent=1 // pred_region
      %55 = dma.done [#allocation6], 1024
    $region25: #{tpu_custom_call.1} parent=1 // pred_fallthru
      _
    %v57 = vld [vmem:[#allocation2] sm:$0xff]
    %v58 = vld [vmem:[#allocation2 + $0x8] sm:$0xff]
    %v59 = vld [vmem:[#allocation2 + $0x10] sm:$0xff]
    %v60 = vld [vmem:[#allocation2 + $0x18] sm:$0xff]
    %v61 = vld [vmem:[#allocation2 + $0x20] sm:$0xff]
    %v62 = vld [vmem:[#allocation2 + $0x28] sm:$0xff]
    %v63 = vld [vmem:[#allocation2 + $0x30] sm:$0xff]
    %v64 = vld [vmem:[#allocation2 + $0x38] sm:$0xff]
    %v65 = vld [vmem:[#allocation5] sm:$0xff]
    %v66 = vld [vmem:[#allocation5 + $0x8] sm:$0xff]
    %v67 = vld [vmem:[#allocation5 + $0x10] sm:$0xff]
    %v68 = vld [vmem:[#allocation5 + $0x18] sm:$0xff]
    %v69 = vld [vmem:[#allocation5 + $0x20] sm:$0xff]
    %v70 = vld [vmem:[#allocation5 + $0x28] sm:$0xff]
    %v71 = vld [vmem:[#allocation5 + $0x30] sm:$0xff]
    %v72 = vld [vmem:[#allocation5 + $0x38] sm:$0xff]
    %v73 = vmul.f32 %v57, %v65
    %v74 = vmul.f32 %v58, %v66
    %v75 = vmul.f32 %v59, %v67
    %v76 = vmul.f32 %v60, %v68
    %v77 = vmul.f32 %v61, %v69
    %v78 = vmul.f32 %v62, %v70
    %v79 = vmul.f32 %v63, %v71
    %v80 = vmul.f32 %v64, %v72
    %v81 = vpack.c.bf16 %v74, %v73
    %v82 = vpack.c.bf16 %v76, %v75
    %v83 = vpack.c.bf16 %v78, %v77
    %v84 = vpack.c.bf16 %v80, %v79
    %v85 = vld [vmem:[#allocation7] sm:$0xf]
    %v86 = vld [vmem:[#allocation7 + $0x4] sm:$0xf]
    %v87 = vld [vmem:[#allocation7 + $0x8] sm:$0xf]
    %v88 = vld [vmem:[#allocation7 + $0xc] sm:$0xf]
    %v89 = vld [vmem:[#allocation7 + $0x10] sm:$0xf]
    %v90 = vld [vmem:[#allocation7 + $0x14] sm:$0xf]
    %v91 = vld [vmem:[#allocation7 + $0x18] sm:$0xf]
    %v92 = vld [vmem:[#allocation7 + $0x1c] sm:$0xf]
    %v93 = vld [vmem:[#allocation7 + $0x20] sm:$0xf]
    %v94 = vld [vmem:[#allocation7 + $0x24] sm:$0xf]
    %v95 = vld [vmem:[#allocation7 + $0x28] sm:$0xf]
    %v96 = vld [vmem:[#allocation7 + $0x2c] sm:$0xf]
    %v97 = vld [vmem:[#allocation7 + $0x30] sm:$0xf]
    %v98 = vld [vmem:[#allocation7 + $0x34] sm:$0xf]
    %v99 = vld [vmem:[#allocation7 + $0x38] sm:$0xf]
    %v100 = vld [vmem:[#allocation7 + $0x3c] sm:$0xf]
    %v117 = vunpack.c.l.b16 %v85
    %v118 = vunpack.c.l.b16 %v86
    %v119 = vunpack.c.l.b16 %v87
    %v120 = vunpack.c.l.b16 %v88
    %v121 = vunpack.c.l.b16 %v89
    %v122 = vunpack.c.l.b16 %v90
    %v123 = vunpack.c.l.b16 %v91
    %v124 = vunpack.c.l.b16 %v92
    %v125 = vunpack.c.l.b16 %v93
    %v126 = vunpack.c.l.b16 %v94
    %v127 = vunpack.c.l.b16 %v95
    %v128 = vunpack.c.l.b16 %v96
    %v129 = vunpack.c.l.b16 %v97
    %v130 = vunpack.c.l.b16 %v98
    %v131 = vunpack.c.l.b16 %v99
    %v132 = vunpack.c.l.b16 %v100
    %v133 = vpack.c.b16 %v118, %v117
    %v134 = vpack.c.b16 %v120, %v119
    %v135 = vpack.c.b16 %v122, %v121
    %v136 = vpack.c.b16 %v124, %v123
    %v137 = vpack.c.b16 %v126, %v125
    %v138 = vpack.c.b16 %v128, %v127
    %v139 = vpack.c.b16 %v130, %v129
    %v140 = vpack.c.b16 %v132, %v131
    %149 = vmatprep.subr.bf16.mxu0 0
    %150 = vmatpush1.bf16.msra.mxu0 %v140
    %151 = vmatprep.subr.bf16.mxu0 0
    %152 = vmatpush1.bf16.msra.mxu0 %v139
    %153 = vmatprep.subr.bf16.mxu0 0
    %154 = vmatpush1.bf16.msra.mxu0 %v138
    %155 = vmatprep.subr.bf16.mxu0 0
    %156 = vmatpush1.bf16.msra.mxu0 %v137
    %157 = vmatprep.subr.bf16.mxu0 0
    %158 = vmatpush1.bf16.msra.mxu0 %v136
    %159 = vmatprep.subr.bf16.mxu0 0
    %160 = vmatpush1.bf16.msra.mxu0 %v135
    %161 = vmatprep.subr.bf16.mxu0 0
    %162 = vmatpush1.bf16.msra.mxu0 %v134
    %163 = vmatprep.subr.bf16.mxu0 0
    %164 = vmatpush1.bf16.msra.mxu0 %v133
    %165 = vmatprep.subr.bf16.mxu0 0
    %166 = vmatpush2.bf16.msra.mxu0 0
    %167 = vmatprep.subr.bf16.mxu0 0
    %168 = vmatpush2.bf16.msra.mxu0 0
    %169 = vmatprep.subr.bf16.mxu0 0
    %170 = vmatpush2.bf16.msra.mxu0 0
    %171 = vmatprep.subr.bf16.mxu0 0
    %172 = vmatpush2.bf16.msra.mxu0 0
    %173 = vmatprep.subr.bf16.mxu0 0
    %174 = vmatpush2.bf16.msra.mxu0 0
    %175 = vmatprep.subr.bf16.mxu0 0
    %176 = vmatpush2.bf16.msra.mxu0 0
    %177 = vmatprep.subr.bf16.mxu0 0
    %178 = vmatpush2.bf16.msra.mxu0 0
    %179 = vmatprep.subr.bf16.mxu0 0
    %180 = vmatpush2.bf16.msra.mxu0 0
    %181 = vmatprep.mubr.bf16.mxu0 0
    %182 = vmatmul.mubr.bf16.gmra.mxu0 %v81
    %v183 = vpop.f32.mrf.mxu0
    %v184 = vadd.f32 0.0, %v183
    %v185 = vpop.f32.mrf.mxu0
    %v186 = vpop.f32.mrf.mxu0
    %v187 = vadd.f32 0.0, %v186
    %v188 = vpop.f32.mrf.mxu0
    %189 = vmatprep.mubr.bf16.mxu0 0
    %190 = vmatmul.mubr.bf16.gmra.mxu0 %v82
    %v191 = vpop.f32.mrf.mxu0
    %v192 = vadd.f32 0.0, %v191
    %v193 = vpop.f32.mrf.mxu0
    %v194 = vpop.f32.mrf.mxu0
    %v195 = vadd.f32 0.0, %v194
    %v196 = vpop.f32.mrf.mxu0
    %197 = vmatprep.mubr.bf16.mxu0 0
    %198 = vmatmul.mubr.bf16.gmra.mxu0 %v83
    %v199 = vpop.f32.mrf.mxu0
    %v200 = vadd.f32 0.0, %v199
    %v201 = vpop.f32.mrf.mxu0
    %v202 = vpop.f32.mrf.mxu0
    %v203 = vadd.f32 0.0, %v202
    %v204 = vpop.f32.mrf.mxu0
    %205 = vmatprep.mubr.bf16.mxu0 0
    %206 = vmatmul.mubr.bf16.gmra.mxu0 %v84
    %v207 = vpop.f32.mrf.mxu0
    %v208 = vadd.f32 0.0, %v207
    %v209 = vpop.f32.mrf.mxu0
    %v210 = vpop.f32.mrf.mxu0
    %v211 = vadd.f32 0.0, %v210
    %v212 = vpop.f32.mrf.mxu0
    %213 = vdwg.mxu0
    %v214 = vpack.c.bf16 %v187, %v184
    %v215 = vpack.c.bf16 %v195, %v192
    %v216 = vpack.c.bf16 %v203, %v200
    %v217 = vpack.c.bf16 %v211, %v208
    %v222 = vunpack.c.l.b16 %v214
    %v223 = vunpack.c.h.b16 %v214
    %v224 = vunpack.c.l.b16 %v215
    %v225 = vunpack.c.h.b16 %v215
    %v226 = vunpack.c.l.b16 %v216
    %v227 = vunpack.c.h.b16 %v216
    %v228 = vunpack.c.l.b16 %v217
    %v229 = vunpack.c.h.b16 %v217
    %v230 = vpack.c.b16 %v222, %v222
    %v231 = vpack.c.b16 %v223, %v223
    %v232 = vpack.c.b16 %v224, %v224
    %v233 = vpack.c.b16 %v225, %v225
    %v234 = vpack.c.b16 %v226, %v226
    %v235 = vpack.c.b16 %v227, %v227
    %v236 = vpack.c.b16 %v228, %v228
    %v237 = vpack.c.b16 %v229, %v229
    %246 = vst [vmem:[#allocation8] sm:$0xf] %v230
    %247 = vst [vmem:[#allocation8 + $0x4] sm:$0xf] %v231
    %248 = vst [vmem:[#allocation8 + $0x8] sm:$0xf] %v232
    %249 = vst [vmem:[#allocation8 + $0xc] sm:$0xf] %v233
    %250 = vst [vmem:[#allocation8 + $0x10] sm:$0xf] %v234
    %251 = vst [vmem:[#allocation8 + $0x14] sm:$0xf] %v235
    %252 = vst [vmem:[#allocation8 + $0x18] sm:$0xf] %v236
    %253 = vst [vmem:[#allocation8 + $0x1c] sm:$0xf] %v237
    // Predicated region
    $region26: #{tpu_custom_call.1} parent=1 // pred_check
      _
    $region27: #{tpu_custom_call.1} parent=1 // pred_check_branch
      %255 = sbr.rel (0) target = $region29
    $region28: #{tpu_custom_call.1} parent=1 // pred_region
      %s257 = ssub.s32 512, 512
      %258 = vsyncadd [#allocation4], %s257
      %s259 = sshll.u32 [#allocation8], 4
      %s260 = int_to_ptr.vmem [resolvable:$true] %s259
      %265 = dma.vmem_to_hbm [thread:$0]  %s260, 512, %s3, [#allocation4], 64, 64, 4
    $region29: #{tpu_custom_call.1} parent=1 // pred_fallthru
      _
    // Predicated region
    $region30: #{tpu_custom_call.1} parent=1 // pred_check
      _
    $region31: #{tpu_custom_call.1} parent=1 // pred_check_branch
      %267 = sbr.rel (0) target = $region33
    $region32: #{tpu_custom_call.1} parent=1 // pred_region
      %268 = dma.done [#allocation4], 512
    $region33: #{tpu_custom_call.1} parent=1 // pred_fallthru
      _
    %269 = vsyncpa [#allocation3], 1
    %270 = vsyncpa [#allocation6], 1
    %271 = vsyncpa [#allocation4], 1

</llo_original>
